<compile_context>
chip_gen: v5e
topology: v5e:2x2
jax: 0.10.0
libtpu: 0.0.40
codegen_flags: <defaults>
</compile_context>

<pallas_src>
import jax
import jax.numpy as jnp
from jax.experimental import pallas as pl
from jax.experimental.pallas import tpu as pltpu


def _round_up(n: int, m: int) -> int:
    return ((n + m - 1) // m) * m


def _make_dpfp_kernel(nu: int, two_d: int):
    # pltpu.roll lowers to an XLU lane rotation only for lane-aligned shapes.
    use_xlu_roll = (two_d % 128 == 0)

    def dpfp_kernel(x_ref, o_ref):
        x = x_ref[...]                                   # (RT, D), input dtype
        r = jnp.maximum(x, jnp.zeros_like(x))            # relu(x)
        y = jnp.concatenate([r, -r], axis=-1)            # (RT, 2*D)

        if use_xlu_roll:
            # XLU rotation (vector-extended slot) -- frees vld/vst slots for
            # the HBM-bound traffic.  Same semantics as jnp/torch.roll(+j).
            rolled = [pltpu.roll(y, shift=j, axis=-1) for j in range(1, nu + 1)]
        else:
            # 2*D is not a multiple of 128 lanes: express roll(y, j) as ONE
            # contiguous slice of the doubled array [y, y]:
            #   roll(y, j)[i] = y[(i - j) mod 2D] = [y, y][2D - j + i]
            yd = jnp.concatenate([y, y], axis=-1)        # (RT, 4*D)
            rolled = [yd[:, two_d - j: 2 * two_d - j] for j in range(1, nu + 1)]

        x_rolled = jnp.concatenate(rolled, axis=-1)      # (RT, 2*D*nu)
        x_repeat = jnp.concatenate([y] * nu, axis=-1)    # (RT, 2*D*nu)

        # Single full-width (lane-dense) multiply, stored directly.
        o_ref[...] = (x_repeat * x_rolled).astype(o_ref.dtype)

    return dpfp_kernel


def _pick_row_tile(rows: int, d: int, out_d: int, dtype_bytes: int,
                   requested: int) -> int:
    """Largest row tile that fits a conservative, cross-generation VMEM budget."""
    # 14 MiB: safely under the v5e 16 MiB scoped default (v6e/v7x default 32 MiB).
    vmem_budget = 14 * 1024 * 1024

    def footprint(t: int) -> int:
        io = 2 * t * (d + out_d) * dtype_bytes     # double-buffered in/out tiles
        tmp = 3 * t * out_d * dtype_bytes          # y / x_rolled / x_repeat / product
        return io + tmp

    rt = min(requested, _round_up(rows, 8))
    rt = max(8, _round_up(rt, 8))
    while rt > 8 and footprint(rt) > vmem_budget:
        rt = max(8, _round_up(rt // 2, 8))
    # Keep at least ~8 grid steps when there is enough work so the parallel
    # grid axis can feed both v7x TensorCores.
    while rt > 128 and rows >= 8 * 128 and rows // rt < 8:
        rt = _round_up(rt // 2, 8)
    return rt


def dpfp_feature_map(x: jax.Array, nu: int = 4, row_tile: int = 1024) -> jax.Array:
    """DPFP feature map.  x: (batch, seq, head_dim) -> (batch, seq, 2*head_dim*nu)."""
    B, T, D = x.shape
    two_d = 2 * D
    out_d = two_d * nu
    if nu > two_d:
        raise ValueError(f"nu={nu} must be <= 2 * head_dim = {two_d}")

    rows = B * T
    dtype_bytes = jnp.dtype(x.dtype).itemsize
    rt = _pick_row_tile(rows, D, out_d, dtype_bytes, row_tile)

    rows_p = _round_up(rows, rt)
    x2 = x.reshape(rows, D)
    if rows_p != rows:
        x2 = jnp.pad(x2, ((0, rows_p - rows), (0, 0)))   # zero rows -> zero output rows

    kernel = _make_dpfp_kernel(nu, two_d)
    out2 = pl.pallas_call(
        kernel,
        out_shape=jax.ShapeDtypeStruct((rows_p, out_d), x.dtype),
        grid_spec=pltpu.PrefetchScalarGridSpec(
            num_scalar_prefetch=0,
            grid=(rows_p // rt,),
            in_specs=[pl.BlockSpec((rt, D), lambda i: (i, 0))],
            out_specs=pl.BlockSpec((rt, out_d), lambda i: (i, 0)),
        ),
        compiler_params=pltpu.CompilerParams(
            dimension_semantics=("parallel",),
        ),
    )(x2)

    if rows_p != rows:
        out2 = out2[:rows]
    return out2.reshape(B, T, out_d)


def dpfp_reference(x: jnp.ndarray, nu: int = 4) -> jnp.ndarray:
    """Pure-JAX reference mirroring the PyTorch forward."""
    r = jnp.maximum(x, 0.0)
    y = jnp.concatenate([r, -r], axis=-1)
    x_rolled = jnp.concatenate(
        [jnp.roll(y, shift=j, axis=-1) for j in range(1, nu + 1)], axis=-1)
    x_repeat = jnp.concatenate([y] * nu, axis=-1)
    return x_repeat * x_rolled


if __name__ == "__main__":
    NU = 4
    key = jax.random.PRNGKey(0)
    k1, k2 = jax.random.split(key)

    # Case 1: batch=2, seq=8, head_dim=32 (rows divide the tile evenly).
    x1 = jax.random.normal(k1, (2, 8, 32), dtype=jnp.float32)
    out1 = jax.block_until_ready(dpfp_feature_map(x1, nu=NU))
    ref1 = dpfp_reference(x1, nu=NU)
    assert out1.shape == (2, 8, 2 * 32 * NU), out1.shape
    assert jnp.allclose(out1, ref1, atol=1e-6, rtol=1e-6), "mismatch vs reference (case 1)"

    # Case 2: ragged row count (exercises the zero-padded last tile).
    x2 = jax.random.normal(k2, (3, 5, 32), dtype=jnp.float32)
    out2 = jax.block_until_ready(dpfp_feature_map(x2, nu=NU))
    ref2 = dpfp_reference(x2, nu=NU)
    assert out2.shape == (3, 5, 2 * 32 * NU), out2.shape
    assert jnp.allclose(out2, ref2, atol=1e-6, rtol=1e-6), "mismatch vs reference (case 2)"

    print("KERNEL_OK")
</pallas_src>

<mosaic_0001>
module attributes {stable_mosaic.version = 11 : i64} {
  func.func @dpfp_kernel(%arg0: i32, %arg1: memref<16x32xf32, #tpu.memory_space<vmem>>, %arg2: memref<16x256xf32, #tpu.memory_space<vmem>>) attributes {dimension_semantics = [#tpu.dimension_semantics<parallel>], iteration_bounds = array<i64: 1>, scalar_prefetch = 0 : i64, scratch_operands = 0 : i64, tpu.core_type = #tpu.core_type<tc>, window_params = [{transform_indices = @transform_0, window_bounds = array<i64: 16, 32>}, {transform_indices = @transform_1, window_bounds = array<i64: 16, 256>}]} {
    %c0 = arith.constant 0 : index
    %c0_0 = arith.constant 0 : index
    %0 = vector.load %arg1[%c0, %c0_0] : memref<16x32xf32, #tpu.memory_space<vmem>>, vector<16x32xf32>
    %cst = arith.constant 0.000000e+00 : f32
    %1 = vector.broadcast %cst : f32 to vector<16x32xf32>
    %2 = arith.maximumf %0, %1 : vector<16x32xf32>
    %cst_1 = arith.constant 0.000000e+00 : f32
    %3 = vector.broadcast %cst_1 : f32 to vector<16x32xf32>
    %4 = arith.subf %3, %2 : vector<16x32xf32>
    %5 = tpu.concatenate %2, %4 in 1 : vector<16x32xf32>, vector<16x32xf32> -> vector<16x64xf32>
    %6 = tpu.concatenate %5, %5 in 1 : vector<16x64xf32>, vector<16x64xf32> -> vector<16x128xf32>
    %7 = vector.extract_strided_slice %6 {offsets = [0, 63], sizes = [16, 64], strides = [1, 1]} : vector<16x128xf32> to vector<16x64xf32>
    %8 = vector.extract_strided_slice %6 {offsets = [0, 62], sizes = [16, 64], strides = [1, 1]} : vector<16x128xf32> to vector<16x64xf32>
    %9 = vector.extract_strided_slice %6 {offsets = [0, 61], sizes = [16, 64], strides = [1, 1]} : vector<16x128xf32> to vector<16x64xf32>
    %10 = vector.extract_strided_slice %6 {offsets = [0, 60], sizes = [16, 64], strides = [1, 1]} : vector<16x128xf32> to vector<16x64xf32>
    %11 = tpu.concatenate %7, %8, %9, %10 in 1 : vector<16x64xf32>, vector<16x64xf32>, vector<16x64xf32>, vector<16x64xf32> -> vector<16x256xf32>
    %12 = tpu.concatenate %5, %5, %5, %5 in 1 : vector<16x64xf32>, vector<16x64xf32>, vector<16x64xf32>, vector<16x64xf32> -> vector<16x256xf32>
    %13 = arith.mulf %12, %11 : vector<16x256xf32>
    %c0_2 = arith.constant 0 : index
    %c0_3 = arith.constant 0 : index
    %14 = vector.load %arg2[%c0_2, %c0_3] : memref<16x256xf32, #tpu.memory_space<vmem>>, vector<16x256xf32>
    tpu.vector_store %arg2[%c0_2, %c0_3], %13 {strides = array<i32>} : memref<16x256xf32, #tpu.memory_space<vmem>>, vector<16x256xf32>,
    return
  }
  func.func @transform_0(%arg0: i32) -> (i32, i32) {
    %c0_i32 = arith.constant 0 : i32
    %c0_i32_0 = arith.constant 0 : i32
    return %arg0, %c0_i32 : i32, i32
  }
  func.func @transform_1(%arg0: i32) -> (i32, i32) {
    %c0_i32 = arith.constant 0 : i32
    %c0_i32_0 = arith.constant 0 : i32
    return %arg0, %c0_i32 : i32, i32
  }
}

</mosaic_0001>

<llo_original>
// kernel: tpu_custom_call.1
$region0: #{tpu_custom_call.1}
  #allocation0 [shape = 'u32[]', space=smem, size = 0x4, offset = 0x4, fixed_abs, tag = 'smem constant byte address 0x4 - core index']
  #allocation1 [shape = 'u32[72,128]{1,0:T(1,128)}', space=vmem, size = 0x9000, scoped, tag = 'internal scratch']
  %s0 = inlined_call_operand.hbm [shape: f32[16,32], index: 0, kind: input, shape index: {}]
  %s1 = inlined_call_operand.hbm [shape: f32[16,256], index: 1, kind: output, shape index: {}]
  %s2 = sld [smem:[#allocation0]]
  $region18: #{tpu_custom_call.1} parent=0
    _
  %s4 = ssub.s32 1, %s2
  %s5 = scalar_select 0, %s4, %s2
  $region1: #{tpu_custom_call.1} parent=0
    #allocation2 [shape = 'u8[8192]{0}', space=vmem, size = 0x2000, scoped, tag = 'input window, operand 0, single buffered']
    #allocation3 [shape = 's32[1]{0}', space=sflag, size = 0x4, scoped, tag = 'scoped memory for tpu_custom_call.1']
    #allocation4 [shape = 's32[1]{0}', space=sflag, size = 0x4, scoped, tag = 'scoped memory for tpu_custom_call.1']
    #allocation5 [shape = 'u8[16384]{0}', space=vmem, size = 0x4000, scoped, tag = 'output window, operand 0, single buffered']
    %6 = vsyncpa [#allocation3], 0
    %7 = vsyncpa [#allocation4], 0
    // Predicated region
    $region2: #{tpu_custom_call.1} parent=1 // pred_check
      _
    $region3: #{tpu_custom_call.1} parent=1 // pred_check_branch
      %9 = sbr.rel (0) target = $region5
    $region4: #{tpu_custom_call.1} parent=1 // pred_region
      %11 = vsyncadd [#allocation3], 0
      %s12 = sshll.u32 %s0, 4
      %s13 = int_to_ptr.hbm [resolvable:$true] %s12
      %s14 = sshll.u32 [#allocation2], 4
      %s15 = int_to_ptr.vmem [resolvable:$true] %s14
      %20 = dma.hbm_to_vmem [thread:$0]  %s13, 256, %s15, [#allocation3], 128, 128, 8
    $region5: #{tpu_custom_call.1} parent=1 // pred_fallthru
      _
    // Predicated region
    $region6: #{tpu_custom_call.1} parent=1 // pred_check
      _
    $region7: #{tpu_custom_call.1} parent=1 // pred_check_branch
      %22 = sbr.rel (0) target = $region9
    $region8: #{tpu_custom_call.1} parent=1 // pred_region
      %24 = dma.done [#allocation3], 256
    $region9: #{tpu_custom_call.1} parent=1 // pred_fallthru
      _
    %v25 = vld [vmem:[#allocation2] sm:$0xff]
    %v26 = vld [vmem:[#allocation2 + $0x8] sm:$0xff]
    %v27 = vmax.f32 %v25, 0.0
    %v28 = vmax.f32 %v26, 0.0
    %v29 = vsub.f32 0.0, %v27
    %v30 = vsub.f32 0.0, %v28
    %33 = vrot.lane.b32.xlu0 %v29, 32
    %v34 = vpop.permute.xlu0 %33
    %35 = vrot.lane.b32.xlu0 %v30, 32
    %v36 = vpop.permute.xlu0 %35
    %vm39 = vcmask 261120
    %v40 = vsel %vm39, %v27, %v34
    %v41 = vsel %vm39, %v28, %v36
    %44 = vrot.lane.b32.xlu0 %v40, 64
    %v45 = vpop.permute.xlu0 %44
    %46 = vrot.lane.b32.xlu0 %v41, 64
    %v47 = vpop.permute.xlu0 %46
    %vm50 = vcmask 523264
    %v51 = vsel %vm50, %v40, %v45
    %v52 = vsel %vm50, %v41, %v47
    %55 = vrot.lane.b32.xlu0 %v51, 65
    %v56 = vpop.permute.xlu0 %55
    %57 = vrot.lane.b32.xlu0 %v52, 65
    %v58 = vpop.permute.xlu0 %57
    %61 = vrot.lane.b32.xlu0 %v51, 2
    %v62 = vpop.permute.xlu0 %61
    %63 = vrot.lane.b32.xlu0 %v52, 2
    %v64 = vpop.permute.xlu0 %63
    %67 = vrot.lane.b32.xlu0 %v51, 67
    %v68 = vpop.permute.xlu0 %67
    %69 = vrot.lane.b32.xlu0 %v52, 67
    %v70 = vpop.permute.xlu0 %69
    %73 = vrot.lane.b32.xlu0 %v51, 4
    %v74 = vpop.permute.xlu0 %73
    %75 = vrot.lane.b32.xlu0 %v52, 4
    %v76 = vpop.permute.xlu0 %75
    %v79 = vsel %vm50, %v56, %v62
    %v80 = vsel %vm50, %v58, %v64
    %v81 = vsel %vm50, %v68, %v74
    %v82 = vsel %vm50, %v70, %v76
    %v83 = vmul.f32 %v51, %v79
    %v84 = vmul.f32 %v51, %v81
    %v85 = vmul.f32 %v52, %v80
    %v86 = vmul.f32 %v52, %v82
    %87 = vst [vmem:[#allocation5] sm:$0xff] %v83
    %88 = vst [vmem:[#allocation5 + $0x8] sm:$0xff] %v84
    %89 = vst [vmem:[#allocation5 + $0x10] sm:$0xff] %v85
    %90 = vst [vmem:[#allocation5 + $0x18] sm:$0xff] %v86
    // Predicated region
    $region10: #{tpu_custom_call.1} parent=1 // pred_check
      _
    $region11: #{tpu_custom_call.1} parent=1 // pred_check_branch
      %92 = sbr.rel (0) target = $region13
    $region12: #{tpu_custom_call.1} parent=1 // pred_region
      %94 = vsyncadd [#allocation4], 0
      %s95 = sshll.u32 [#allocation5], 4
      %s96 = int_to_ptr.vmem [resolvable:$true] %s95
      %s97 = sshll.u32 %s1, 4
      %s98 = int_to_ptr.hbm [resolvable:$true] %s97
      %103 = dma.vmem_to_hbm [thread:$0]  %s96, 512, %s98, [#allocation4], 256, 256, 16
    $region13: #{tpu_custom_call.1} parent=1 // pred_fallthru
      _
    // Predicated region
    $region14: #{tpu_custom_call.1} parent=1 // pred_check
      _
    $region15: #{tpu_custom_call.1} parent=1 // pred_check_branch
      %105 = sbr.rel (0) target = $region17
    $region16: #{tpu_custom_call.1} parent=1 // pred_region
      %107 = dma.done [#allocation4], 512
    $region17: #{tpu_custom_call.1} parent=1 // pred_fallthru
      _
    %108 = vsyncpa [#allocation3], 1
    %109 = vsyncpa [#allocation4], 1

</llo_original>
